<compile_context>
chip_gen: v5e
topology: v5e:2x2
jax: 0.10.0
libtpu: 0.0.40
codegen_flags: <defaults>
</compile_context>

<pallas_src>
import functools

import jax
import jax.numpy as jnp
from jax import lax
from jax.experimental import pallas as pl
from jax.experimental.pallas import tpu as pltpu


def _round_up(x, m):
    return (x + m - 1) // m * m


def _dwm3d_kernel(x_ref, w_ref, o_ref, x9_ref, *, To, kD, kH, kW, Cp, W, HWout):
    """One grid step = one (batch, output-depth tile).

    x_ref : (Dp, Cp, HWin)     bf16  full depth stack for this batch; channels in
                                     sublanes, flattened (H*W)+pad in lanes.
    w_ref : (kD, K, kH*kW*Cp)  bf16  folded weights, contraction in lanes, resident.
    o_ref : (To, K, HWout)     f32   lane-dense output tile ("same"-layout spatial).
    x9_ref: (kH*kW*Cp, HWout)  bf16  stacked in-plane taps of ONE input plane.
    """
    d_base = pl.program_id(1) * To

    # Input-plane-major: each of the To+kD-1 planes feeding this tile is loaded
    # and tap-stacked exactly once, then contributes to every output plane
    # od_l = dl - kd it overlaps.  Fully static (Python-unrolled) structure.
    for dl in range(To + kD - 1):
        plane = x_ref[d_base + dl]                       # (Cp, HWin) bf16

        # Fold the kH*kW in-plane taps into the contraction: static lane shifts,
        # sublane-aligned (Cp % 8 == 0) and lane-dense (HWout % 128 == 0) stores.
        for kh in range(kH):
            for kw in range(kW):
                t = kh * kW + kw
                off = kh * W + kw                        # static lane offset
                x9_ref[t * Cp:(t + 1) * Cp, :] = plane[:, off:off + HWout]

        # One fat (K, 9C) @ (9C, HWout) MXU matmul per overlapped output plane,
        # accumulated directly into the resident f32 output tile.
        for kd in range(kD):
            od_l = dl - kd
            if 0 <= od_l < To:
                contrib = jnp.dot(w_ref[kd], x9_ref[...],
                                  preferred_element_type=jnp.float32)
                if kd == 0:                              # first contribution
                    o_ref[od_l] = contrib
                else:
                    o_ref[od_l] += contrib


def dwm3d(x, w, bias=None, stride=(1, 1, 1)):
    """3D convolution (valid padding, stride 1) as a Pallas TPU kernel.

    x: (B, C, D, H, W) float32   w: (K, C, kD, kH, kW) float32
    returns y: (B, K, oD, oH, oW) float32
    """
    assert stride == (1, 1, 1), "only stride (1,1,1) supported (as in the module)"
    assert bias is None
    B, C, D, H, W = x.shape
    K, Cw, kD, kH, kW = w.shape
    assert C == Cw
    oD, oH, oW = D - kD + 1, H - kH + 1, W - kW + 1
    assert oD >= 1 and oH >= 1 and oW >= 1

    Cp = _round_up(C, 8)                       # sublane-aligned channel count
    HW = H * W
    HWout = _round_up(HW, 128)                 # lane-dense output row length
    max_off = (kH - 1) * W + (kW - 1)          # largest static in-plane lane shift
    HWin = _round_up(HWout + max_off, 128)     # input row length covering all shifts

    # ~2 depth tiles per batch so v7x's two TensorCores both get work even at B=1,
    # while keeping the total step count tiny (B * n_tiles).
    n_tiles = 2 if oD >= 2 else 1
    To = pl.cdiv(oD, n_tiles)
    n_tiles = pl.cdiv(oD, To)
    oDp = n_tiles * To
    Dp = oDp + kD - 1                          # >= D; zero-padded planes are cropped

    # ---- glue (cheap, single pass): layout + bf16 cast ----
    # x: (B,C,D,H,W) -> (B, D, Cp, HWin): channels in sublanes, flat spatial in lanes.
    x_t = jnp.transpose(x, (0, 2, 1, 3, 4)).reshape(B, D, C, HW)
    x_t = jnp.pad(x_t, ((0, 0), (0, Dp - D), (0, Cp - C), (0, HWin - HW)))
    x_t = x_t.astype(jnp.bfloat16)

    # w_fold[kd, k, (kh*kW+kw)*Cp + c] = w[k, c, kd, kh, kw]; contraction in lanes.
    R = kH * kW * Cp
    w_t = jnp.transpose(w, (2, 3, 4, 1, 0))                        # (kD,kH,kW,C,K)
    w_t = jnp.pad(w_t, ((0, 0), (0, 0), (0, 0), (0, Cp - C), (0, 0)))
    w_t = jnp.transpose(w_t, (0, 4, 1, 2, 3)).reshape(kD, K, R).astype(jnp.bfloat16)

    kernel = functools.partial(_dwm3d_kernel, To=To, kD=kD, kH=kH, kW=kW,
                               Cp=Cp, W=W, HWout=HWout)

    y = pl.pallas_call(
        kernel,
        out_shape=jax.ShapeDtypeStruct((B, oDp, K, HWout), jnp.float32),
        grid_spec=pltpu.PrefetchScalarGridSpec(
            num_scalar_prefetch=0,
            grid=(B, n_tiles),
            in_specs=[
                # Whole depth stack per batch; block index constant across the
                # tile axis -> DMA'd once per batch, resident across tiles.
                pl.BlockSpec((None, Dp, Cp, HWin), lambda b, dt: (b, 0, 0, 0)),
                # Folded weights fully resident in VMEM (fetched once).
                pl.BlockSpec((kD, K, R), lambda b, dt: (0, 0, 0)),
            ],
            out_specs=pl.BlockSpec((None, To, K, HWout),
                                   lambda b, dt: (b, dt, 0, 0)),
            scratch_shapes=[pltpu.VMEM((R, HWout), jnp.bfloat16)],
        ),
        compiler_params=pltpu.CompilerParams(
            dimension_semantics=("parallel", "parallel"),
        ),
    )(x_t, w_t)

    # (B, oDp, K, HWout) "same"-layout -> crop to the valid conv output, NCDHW.
    y = y[:, :oD, :, :HW].reshape(B, oD, K, H, W)[:, :, :, :oH, :oW]
    return jnp.transpose(y, (0, 2, 1, 3, 4))        # (B, K, oD, oH, oW), f32


class Dwm:
    """JAX/Pallas port of the PyTorch Dwm module: forward(x, w) = dwm3d(x, w, None, (1,1,1))."""

    def forward(self, x, w):
        return dwm3d(x, w, None, (1, 1, 1))

    __call__ = forward


if __name__ == "__main__":
    # Small shapes consistent with the module's (B, C, D, H, W) / (K, C, 3, 3, 3)
    # conv; original was x=(1,32,8,28,28), w=(32,32,3,3,3), scaled down here.
    B, C, D, H, W = 2, 8, 6, 10, 12
    K, kD, kH, kW = 8, 3, 3, 3

    key = jax.random.PRNGKey(0)
    kx, kw_ = jax.random.split(key)
    x = jax.random.uniform(kx, (B, C, D, H, W), dtype=jnp.float32)
    w = jax.random.uniform(kw_, (K, C, kD, kH, kW), dtype=jnp.float32)

    model = Dwm()
    y = jax.block_until_ready(model(x, w))

    # Reference check against XLA's conv3d (valid padding, stride 1).  Inputs are
    # cast to bf16 inside the kernel (f32 accumulation), so use a relative bound.
    y_ref = lax.conv_general_dilated(
        x, w,
        window_strides=(1, 1, 1),
        padding="VALID",
        dimension_numbers=("NCDHW", "OIDHW", "NCDHW"),
    )
    assert y.shape == (B, K, D - kD + 1, H - kH + 1, W - kW + 1), y.shape
    rel_err = float(jnp.max(jnp.abs(y - y_ref)) / (jnp.max(jnp.abs(y_ref)) + 1e-6))
    assert rel_err < 2e-2, rel_err
    print("KERNEL_OK")
</pallas_src>

<mosaic_0001>
module attributes {stable_mosaic.version = 11 : i64} {
  func.func @_dwm3d_kernel(%arg0: i32, %arg1: i32, %arg2: memref<1x6x8x256xbf16, #tpu.memory_space<vmem>>, %arg3: memref<3x8x72xbf16, #tpu.memory_space<vmem>>, %arg4: memref<1x2x8x128xf32, #tpu.memory_space<vmem>>, %arg5: memref<72x128xbf16, #tpu.memory_space<vmem>>) attributes {dimension_semantics = [#tpu.dimension_semantics<parallel>, #tpu.dimension_semantics<parallel>], iteration_bounds = array<i64: 2, 2>, scalar_prefetch = 0 : i64, scratch_operands = 1 : i64, tpu.core_type = #tpu.core_type<tc>, window_params = [{transform_indices = @transform_0, window_bounds = array<i64: 1, 6, 8, 256>}, {pipeline_mode = #tpu.pipeline_mode<synchronous>, transform_indices = @transform_1, window_bounds = array<i64: 3, 8, 72>}, {transform_indices = @transform_2, window_bounds = array<i64: 1, 2, 8, 128>}]} {
    %c2_i32 = arith.constant 2 : i32
    %0 = arith.muli %arg1, %c2_i32 : i32
    %c0_i32 = arith.constant 0 : i32
    %1 = arith.addi %0, %c0_i32 : i32
    %c0 = arith.constant 0 : index
    %2 = arith.index_cast %1 : i32 to index
    %c0_0 = arith.constant 0 : index
    %c0_1 = arith.constant 0 : index
    %3 = vector.load %arg2[%c0, %2, %c0_0, %c0_1] : memref<1x6x8x256xbf16, #tpu.memory_space<vmem>>, vector<1x1x8x256xbf16>
    %4 = vector.shape_cast %3 : vector<1x1x8x256xbf16> to vector<8x256xbf16>
    %5 = vector.extract_strided_slice %4 {offsets = [0, 0], sizes = [8, 128], strides = [1, 1]} : vector<8x256xbf16> to vector<8x128xbf16>
    %c0_2 = arith.constant 0 : index
    %c0_3 = arith.constant 0 : index
    %6 = vector.load %arg5[%c0_2, %c0_3] : memref<72x128xbf16, #tpu.memory_space<vmem>>, vector<8x128xbf16>
    tpu.vector_store %arg5[%c0_2, %c0_3], %5 {strides = array<i32>} : memref<72x128xbf16, #tpu.memory_space<vmem>>, vector<8x128xbf16>,
    %7 = vector.extract_strided_slice %4 {offsets = [0, 1], sizes = [8, 128], strides = [1, 1]} : vector<8x256xbf16> to vector<8x128xbf16>
    %c8 = arith.constant 8 : index
    %c0_4 = arith.constant 0 : index
    %8 = vector.load %arg5[%c8, %c0_4] : memref<72x128xbf16, #tpu.memory_space<vmem>>, vector<8x128xbf16>
    tpu.vector_store %arg5[%c8, %c0_4], %7 {strides = array<i32>} : memref<72x128xbf16, #tpu.memory_space<vmem>>, vector<8x128xbf16>,
    %9 = vector.extract_strided_slice %4 {offsets = [0, 2], sizes = [8, 128], strides = [1, 1]} : vector<8x256xbf16> to vector<8x128xbf16>
    %c16 = arith.constant 16 : index
    %c0_5 = arith.constant 0 : index
    %10 = vector.load %arg5[%c16, %c0_5] : memref<72x128xbf16, #tpu.memory_space<vmem>>, vector<8x128xbf16>
    tpu.vector_store %arg5[%c16, %c0_5], %9 {strides = array<i32>} : memref<72x128xbf16, #tpu.memory_space<vmem>>, vector<8x128xbf16>,
    %11 = vector.extract_strided_slice %4 {offsets = [0, 12], sizes = [8, 128], strides = [1, 1]} : vector<8x256xbf16> to vector<8x128xbf16>
    %c24 = arith.constant 24 : index
    %c0_6 = arith.constant 0 : index
    %12 = vector.load %arg5[%c24, %c0_6] : memref<72x128xbf16, #tpu.memory_space<vmem>>, vector<8x128xbf16>
    tpu.vector_store %arg5[%c24, %c0_6], %11 {strides = array<i32>} : memref<72x128xbf16, #tpu.memory_space<vmem>>, vector<8x128xbf16>,
    %13 = vector.extract_strided_slice %4 {offsets = [0, 13], sizes = [8, 128], strides = [1, 1]} : vector<8x256xbf16> to vector<8x128xbf16>
    %c32 = arith.constant 32 : index
    %c0_7 = arith.constant 0 : index
    %14 = vector.load %arg5[%c32, %c0_7] : memref<72x128xbf16, #tpu.memory_space<vmem>>, vector<8x128xbf16>
    tpu.vector_store %arg5[%c32, %c0_7], %13 {strides = array<i32>} : memref<72x128xbf16, #tpu.memory_space<vmem>>, vector<8x128xbf16>,
    %15 = vector.extract_strided_slice %4 {offsets = [0, 14], sizes = [8, 128], strides = [1, 1]} : vector<8x256xbf16> to vector<8x128xbf16>
    %c40 = arith.constant 40 : index
    %c0_8 = arith.constant 0 : index
    %16 = vector.load %arg5[%c40, %c0_8] : memref<72x128xbf16, #tpu.memory_space<vmem>>, vector<8x128xbf16>
    tpu.vector_store %arg5[%c40, %c0_8], %15 {strides = array<i32>} : memref<72x128xbf16, #tpu.memory_space<vmem>>, vector<8x128xbf16>,
    %17 = vector.extract_strided_slice %4 {offsets = [0, 24], sizes = [8, 128], strides = [1, 1]} : vector<8x256xbf16> to vector<8x128xbf16>
    %c48 = arith.constant 48 : index
    %c0_9 = arith.constant 0 : index
    %18 = vector.load %arg5[%c48, %c0_9] : memref<72x128xbf16, #tpu.memory_space<vmem>>, vector<8x128xbf16>
    tpu.vector_store %arg5[%c48, %c0_9], %17 {strides = array<i32>} : memref<72x128xbf16, #tpu.memory_space<vmem>>, vector<8x128xbf16>,
    %19 = vector.extract_strided_slice %4 {offsets = [0, 25], sizes = [8, 128], strides = [1, 1]} : vector<8x256xbf16> to vector<8x128xbf16>
    %c56 = arith.constant 56 : index
    %c0_10 = arith.constant 0 : index
    %20 = vector.load %arg5[%c56, %c0_10] : memref<72x128xbf16, #tpu.memory_space<vmem>>, vector<8x128xbf16>
    tpu.vector_store %arg5[%c56, %c0_10], %19 {strides = array<i32>} : memref<72x128xbf16, #tpu.memory_space<vmem>>, vector<8x128xbf16>,
    %21 = vector.extract_strided_slice %4 {offsets = [0, 26], sizes = [8, 128], strides = [1, 1]} : vector<8x256xbf16> to vector<8x128xbf16>
    %c64 = arith.constant 64 : index
    %c0_11 = arith.constant 0 : index
    %22 = vector.load %arg5[%c64, %c0_11] : memref<72x128xbf16, #tpu.memory_space<vmem>>, vector<8x128xbf16>
    tpu.vector_store %arg5[%c64, %c0_11], %21 {strides = array<i32>} : memref<72x128xbf16, #tpu.memory_space<vmem>>, vector<8x128xbf16>,
    %c0_12 = arith.constant 0 : index
    %c0_13 = arith.constant 0 : index
    %c0_14 = arith.constant 0 : index
    %23 = vector.load %arg3[%c0_12, %c0_13, %c0_14] : memref<3x8x72xbf16, #tpu.memory_space<vmem>>, vector<1x8x72xbf16>
    %24 = vector.shape_cast %23 : vector<1x8x72xbf16> to vector<8x72xbf16>
    %c0_15 = arith.constant 0 : index
    %c0_16 = arith.constant 0 : index
    %25 = vector.load %arg5[%c0_15, %c0_16] : memref<72x128xbf16, #tpu.memory_space<vmem>>, vector<72x128xbf16>
    %cst = arith.constant dense<0.000000e+00> : vector<8x128xf32>
    %26 = tpu.matmul %24, %25, %cst {dimension_numbers = #tpu.dot_dimension_numbers<[1], [0], [0], [1], [0, 0, 1, 1], [], []>} : vector<8x72xbf16>, vector<72x128xbf16>, vector<8x128xf32> -> vector<8x128xf32>
    %c0_17 = arith.constant 0 : index
    %c0_18 = arith.constant 0 : index
    %c0_19 = arith.constant 0 : index
    %c0_20 = arith.constant 0 : index
    %27 = vector.load %arg4[%c0_17, %c0_18, %c0_19, %c0_20] : memref<1x2x8x128xf32, #tpu.memory_space<vmem>>, vector<1x1x8x128xf32>
    %28 = vector.shape_cast %27 : vector<1x1x8x128xf32> to vector<8x128xf32>
    %29 = vector.shape_cast %26 : vector<8x128xf32> to vector<1x1x8x128xf32>
    tpu.vector_store %arg4[%c0_17, %c0_18, %c0_19, %c0_20], %29 {strides = array<i32>} : memref<1x2x8x128xf32, #tpu.memory_space<vmem>>, vector<1x1x8x128xf32>,
    %c1_i32 = arith.constant 1 : i32
    %30 = arith.addi %0, %c1_i32 : i32
    %c0_21 = arith.constant 0 : index
    %31 = arith.index_cast %30 : i32 to index
    %c0_22 = arith.constant 0 : index
    %c0_23 = arith.constant 0 : index
    %32 = vector.load %arg2[%c0_21, %31, %c0_22, %c0_23] : memref<1x6x8x256xbf16, #tpu.memory_space<vmem>>, vector<1x1x8x256xbf16>
    %33 = vector.shape_cast %32 : vector<1x1x8x256xbf16> to vector<8x256xbf16>
    %34 = vector.extract_strided_slice %33 {offsets = [0, 0], sizes = [8, 128], strides = [1, 1]} : vector<8x256xbf16> to vector<8x128xbf16>
    %c0_24 = arith.constant 0 : index
    %c0_25 = arith.constant 0 : index
    %35 = vector.load %arg5[%c0_24, %c0_25] : memref<72x128xbf16, #tpu.memory_space<vmem>>, vector<8x128xbf16>
    tpu.vector_store %arg5[%c0_24, %c0_25], %34 {strides = array<i32>} : memref<72x128xbf16, #tpu.memory_space<vmem>>, vector<8x128xbf16>,
    %36 = vector.extract_strided_slice %33 {offsets = [0, 1], sizes = [8, 128], strides = [1, 1]} : vector<8x256xbf16> to vector<8x128xbf16>
    %c8_26 = arith.constant 8 : index
    %c0_27 = arith.constant 0 : index
    %37 = vector.load %arg5[%c8_26, %c0_27] : memref<72x128xbf16, #tpu.memory_space<vmem>>, vector<8x128xbf16>
    tpu.vector_store %arg5[%c8_26, %c0_27], %36 {strides = array<i32>} : memref<72x128xbf16, #tpu.memory_space<vmem>>, vector<8x128xbf16>,
    %38 = vector.extract_strided_slice %33 {offsets = [0, 2], sizes = [8, 128], strides = [1, 1]} : vector<8x256xbf16> to vector<8x128xbf16>
    %c16_28 = arith.constant 16 : index
    %c0_29 = arith.constant 0 : index
    %39 = vector.load %arg5[%c16_28, %c0_29] : memref<72x128xbf16, #tpu.memory_space<vmem>>, vector<8x128xbf16>
    tpu.vector_store %arg5[%c16_28, %c0_29], %38 {strides = array<i32>} : memref<72x128xbf16, #tpu.memory_space<vmem>>, vector<8x128xbf16>,
    %40 = vector.extract_strided_slice %33 {offsets = [0, 12], sizes = [8, 128], strides = [1, 1]} : vector<8x256xbf16> to vector<8x128xbf16>
    %c24_30 = arith.constant 24 : index
    %c0_31 = arith.constant 0 : index
    %41 = vector.load %arg5[%c24_30, %c0_31] : memref<72x128xbf16, #tpu.memory_space<vmem>>, vector<8x128xbf16>
    tpu.vector_store %arg5[%c24_30, %c0_31], %40 {strides = array<i32>} : memref<72x128xbf16, #tpu.memory_space<vmem>>, vector<8x128xbf16>,
    %42 = vector.extract_strided_slice %33 {offsets = [0, 13], sizes = [8, 128], strides = [1, 1]} : vector<8x256xbf16> to vector<8x128xbf16>
    %c32_32 = arith.constant 32 : index
    %c0_33 = arith.constant 0 : index
    %43 = vector.load %arg5[%c32_32, %c0_33] : memref<72x128xbf16, #tpu.memory_space<vmem>>, vector<8x128xbf16>
    tpu.vector_store %arg5[%c32_32, %c0_33], %42 {strides = array<i32>} : memref<72x128xbf16, #tpu.memory_space<vmem>>, vector<8x128xbf16>,
    %44 = vector.extract_strided_slice %33 {offsets = [0, 14], sizes = [8, 128], strides = [1, 1]} : vector<8x256xbf16> to vector<8x128xbf16>
    %c40_34 = arith.constant 40 : index
    %c0_35 = arith.constant 0 : index
    %45 = vector.load %arg5[%c40_34, %c0_35] : memref<72x128xbf16, #tpu.memory_space<vmem>>, vector<8x128xbf16>
    tpu.vector_store %arg5[%c40_34, %c0_35], %44 {strides = array<i32>} : memref<72x128xbf16, #tpu.memory_space<vmem>>, vector<8x128xbf16>,
    %46 = vector.extract_strided_slice %33 {offsets = [0, 24], sizes = [8, 128], strides = [1, 1]} : vector<8x256xbf16> to vector<8x128xbf16>
    %c48_36 = arith.constant 48 : index
    %c0_37 = arith.constant 0 : index
    %47 = vector.load %arg5[%c48_36, %c0_37] : memref<72x128xbf16, #tpu.memory_space<vmem>>, vector<8x128xbf16>
    tpu.vector_store %arg5[%c48_36, %c0_37], %46 {strides = array<i32>} : memref<72x128xbf16, #tpu.memory_space<vmem>>, vector<8x128xbf16>,
    %48 = vector.extract_strided_slice %33 {offsets = [0, 25], sizes = [8, 128], strides = [1, 1]} : vector<8x256xbf16> to vector<8x128xbf16>
    %c56_38 = arith.constant 56 : index
    %c0_39 = arith.constant 0 : index
    %49 = vector.load %arg5[%c56_38, %c0_39] : memref<72x128xbf16, #tpu.memory_space<vmem>>, vector<8x128xbf16>
    tpu.vector_store %arg5[%c56_38, %c0_39], %48 {strides = array<i32>} : memref<72x128xbf16, #tpu.memory_space<vmem>>, vector<8x128xbf16>,
    %50 = vector.extract_strided_slice %33 {offsets = [0, 26], sizes = [8, 128], strides = [1, 1]} : vector<8x256xbf16> to vector<8x128xbf16>
    %c64_40 = arith.constant 64 : index
    %c0_41 = arith.constant 0 : index
    %51 = vector.load %arg5[%c64_40, %c0_41] : memref<72x128xbf16, #tpu.memory_space<vmem>>, vector<8x128xbf16>
    tpu.vector_store %arg5[%c64_40, %c0_41], %50 {strides = array<i32>} : memref<72x128xbf16, #tpu.memory_space<vmem>>, vector<8x128xbf16>,
    %c0_42 = arith.constant 0 : index
    %c0_43 = arith.constant 0 : index
    %c0_44 = arith.constant 0 : index
    %52 = vector.load %arg3[%c0_42, %c0_43, %c0_44] : memref<3x8x72xbf16, #tpu.memory_space<vmem>>, vector<1x8x72xbf16>
    %53 = vector.shape_cast %52 : vector<1x8x72xbf16> to vector<8x72xbf16>
    %c0_45 = arith.constant 0 : index
    %c0_46 = arith.constant 0 : index
    %54 = vector.load %arg5[%c0_45, %c0_46] : memref<72x128xbf16, #tpu.memory_space<vmem>>, vector<72x128xbf16>
    %cst_47 = arith.constant dense<0.000000e+00> : vector<8x128xf32>
    %55 = tpu.matmul %53, %54, %cst_47 {dimension_numbers = #tpu.dot_dimension_numbers<[1], [0], [0], [1], [0, 0, 1, 1], [], []>} : vector<8x72xbf16>, vector<72x128xbf16>, vector<8x128xf32> -> vector<8x128xf32>
    %c0_48 = arith.constant 0 : index
    %c1 = arith.constant 1 : index
    %c0_49 = arith.constant 0 : index
    %c0_50 = arith.constant 0 : index
    %56 = vector.load %arg4[%c0_48, %c1, %c0_49, %c0_50] : memref<1x2x8x128xf32, #tpu.memory_space<vmem>>, vector<1x1x8x128xf32>
    %57 = vector.shape_cast %56 : vector<1x1x8x128xf32> to vector<8x128xf32>
    %58 = vector.shape_cast %55 : vector<8x128xf32> to vector<1x1x8x128xf32>
    tpu.vector_store %arg4[%c0_48, %c1, %c0_49, %c0_50], %58 {strides = array<i32>} : memref<1x2x8x128xf32, #tpu.memory_space<vmem>>, vector<1x1x8x128xf32>,
    %c1_51 = arith.constant 1 : index
    %c0_52 = arith.constant 0 : index
    %c0_53 = arith.constant 0 : index
    %59 = vector.load %arg3[%c1_51, %c0_52, %c0_53] : memref<3x8x72xbf16, #tpu.memory_space<vmem>>, vector<1x8x72xbf16>
    %60 = vector.shape_cast %59 : vector<1x8x72xbf16> to vector<8x72xbf16>
    %c0_54 = arith.constant 0 : index
    %c0_55 = arith.constant 0 : index
    %61 = vector.load %arg5[%c0_54, %c0_55] : memref<72x128xbf16, #tpu.memory_space<vmem>>, vector<72x128xbf16>
    %cst_56 = arith.constant dense<0.000000e+00> : vector<8x128xf32>
    %62 = tpu.matmul %60, %61, %cst_56 {dimension_numbers = #tpu.dot_dimension_numbers<[1], [0], [0], [1], [0, 0, 1, 1], [], []>} : vector<8x72xbf16>, vector<72x128xbf16>, vector<8x128xf32> -> vector<8x128xf32>
    %c0_57 = arith.constant 0 : index
    %c0_58 = arith.constant 0 : index
    %c0_59 = arith.constant 0 : index
    %c0_60 = arith.constant 0 : index
    %63 = vector.load %arg4[%c0_57, %c0_58, %c0_59, %c0_60] : memref<1x2x8x128xf32, #tpu.memory_space<vmem>>, vector<1x1x8x128xf32>
    %64 = vector.shape_cast %63 : vector<1x1x8x128xf32> to vector<8x128xf32>
    %65 = arith.addf %64, %62 : vector<8x128xf32>
    %c0_61 = arith.constant 0 : index
    %c0_62 = arith.constant 0 : index
    %c0_63 = arith.constant 0 : index
    %c0_64 = arith.constant 0 : index
    %66 = vector.load %arg4[%c0_61, %c0_62, %c0_63, %c0_64] : memref<1x2x8x128xf32, #tpu.memory_space<vmem>>, vector<1x1x8x128xf32>
    %67 = vector.shape_cast %66 : vector<1x1x8x128xf32> to vector<8x128xf32>
    %68 = vector.shape_cast %65 : vector<8x128xf32> to vector<1x1x8x128xf32>
    tpu.vector_store %arg4[%c0_61, %c0_62, %c0_63, %c0_64], %68 {strides = array<i32>} : memref<1x2x8x128xf32, #tpu.memory_space<vmem>>, vector<1x1x8x128xf32>,
    %c2_i32_65 = arith.constant 2 : i32
    %69 = arith.addi %0, %c2_i32_65 : i32
    %c0_66 = arith.constant 0 : index
    %70 = arith.index_cast %69 : i32 to index
    %c0_67 = arith.constant 0 : index
    %c0_68 = arith.constant 0 : index
    %71 = vector.load %arg2[%c0_66, %70, %c0_67, %c0_68] : memref<1x6x8x256xbf16, #tpu.memory_space<vmem>>, vector<1x1x8x256xbf16>
    %72 = vector.shape_cast %71 : vector<1x1x8x256xbf16> to vector<8x256xbf16>
    %73 = vector.extract_strided_slice %72 {offsets = [0, 0], sizes = [8, 128], strides = [1, 1]} : vector<8x256xbf16> to vector<8x128xbf16>
    %c0_69 = arith.constant 0 : index
    %c0_70 = arith.constant 0 : index
    %74 = vector.load %arg5[%c0_69, %c0_70] : memref<72x128xbf16, #tpu.memory_space<vmem>>, vector<8x128xbf16>
    tpu.vector_store %arg5[%c0_69, %c0_70], %73 {strides = array<i32>} : memref<72x128xbf16, #tpu.memory_space<vmem>>, vector<8x128xbf16>,
    %75 = vector.extract_strided_slice %72 {offsets = [0, 1], sizes = [8, 128], strides = [1, 1]} : vector<8x256xbf16> to vector<8x128xbf16>
    %c8_71 = arith.constant 8 : index
    %c0_72 = arith.constant 0 : index
    %76 = vector.load %arg5[%c8_71, %c0_72] : memref<72x128xbf16, #tpu.memory_space<vmem>>, vector<8x128xbf16>
    tpu.vector_store %arg5[%c8_71, %c0_72], %75 {strides = array<i32>} : memref<72x128xbf16, #tpu.memory_space<vmem>>, vector<8x128xbf16>,
    %77 = vector.extract_strided_slice %72 {offsets = [0, 2], sizes = [8, 128], strides = [1, 1]} : vector<8x256xbf16> to vector<8x128xbf16>
    %c16_73 = arith.constant 16 : index
    %c0_74 = arith.constant 0 : index
    %78 = vector.load %arg5[%c16_73, %c0_74] : memref<72x128xbf16, #tpu.memory_space<vmem>>, vector<8x128xbf16>
    tpu.vector_store %arg5[%c16_73, %c0_74], %77 {strides = array<i32>} : memref<72x128xbf16, #tpu.memory_space<vmem>>, vector<8x128xbf16>,
    %79 = vector.extract_strided_slice %72 {offsets = [0, 12], sizes = [8, 128], strides = [1, 1]} : vector<8x256xbf16> to vector<8x128xbf16>
    %c24_75 = arith.constant 24 : index
    %c0_76 = arith.constant 0 : index
    %80 = vector.load %arg5[%c24_75, %c0_76] : memref<72x128xbf16, #tpu.memory_space<vmem>>, vector<8x128xbf16>
    tpu.vector_store %arg5[%c24_75, %c0_76], %79 {strides = array<i32>} : memref<72x128xbf16, #tpu.memory_space<vmem>>, vector<8x128xbf16>,
    %81 = vector.extract_strided_slice %72 {offsets = [0, 13], sizes = [8, 128], strides = [1, 1]} : vector<8x256xbf16> to vector<8x128xbf16>
    %c32_77 = arith.constant 32 : index
    %c0_78 = arith.constant 0 : index
    %82 = vector.load %arg5[%c32_77, %c0_78] : memref<72x128xbf16, #tpu.memory_space<vmem>>, vector<8x128xbf16>
    tpu.vector_store %arg5[%c32_77, %c0_78], %81 {strides = array<i32>} : memref<72x128xbf16, #tpu.memory_space<vmem>>, vector<8x128xbf16>,
    %83 = vector.extract_strided_slice %72 {offsets = [0, 14], sizes = [8, 128], strides = [1, 1]} : vector<8x256xbf16> to vector<8x128xbf16>
    %c40_79 = arith.constant 40 : index
    %c0_80 = arith.constant 0 : index
    %84 = vector.load %arg5[%c40_79, %c0_80] : memref<72x128xbf16, #tpu.memory_space<vmem>>, vector<8x128xbf16>
    tpu.vector_store %arg5[%c40_79, %c0_80], %83 {strides = array<i32>} : memref<72x128xbf16, #tpu.memory_space<vmem>>, vector<8x128xbf16>,
    %85 = vector.extract_strided_slice %72 {offsets = [0, 24], sizes = [8, 128], strides = [1, 1]} : vector<8x256xbf16> to vector<8x128xbf16>
    %c48_81 = arith.constant 48 : index
    %c0_82 = arith.constant 0 : index
    %86 = vector.load %arg5[%c48_81, %c0_82] : memref<72x128xbf16, #tpu.memory_space<vmem>>, vector<8x128xbf16>
    tpu.vector_store %arg5[%c48_81, %c0_82], %85 {strides = array<i32>} : memref<72x128xbf16, #tpu.memory_space<vmem>>, vector<8x128xbf16>,
    %87 = vector.extract_strided_slice %72 {offsets = [0, 25], sizes = [8, 128], strides = [1, 1]} : vector<8x256xbf16> to vector<8x128xbf16>
    %c56_83 = arith.constant 56 : index
    %c0_84 = arith.constant 0 : index
    %88 = vector.load %arg5[%c56_83, %c0_84] : memref<72x128xbf16, #tpu.memory_space<vmem>>, vector<8x128xbf16>
    tpu.vector_store %arg5[%c56_83, %c0_84], %87 {strides = array<i32>} : memref<72x128xbf16, #tpu.memory_space<vmem>>, vector<8x128xbf16>,
    %89 = vector.extract_strided_slice %72 {offsets = [0, 26], sizes = [8, 128], strides = [1, 1]} : vector<8x256xbf16> to vector<8x128xbf16>
    %c64_85 = arith.constant 64 : index
    %c0_86 = arith.constant 0 : index
    %90 = vector.load %arg5[%c64_85, %c0_86] : memref<72x128xbf16, #tpu.memory_space<vmem>>, vector<8x128xbf16>
    tpu.vector_store %arg5[%c64_85, %c0_86], %89 {strides = array<i32>} : memref<72x128xbf16, #tpu.memory_space<vmem>>, vector<8x128xbf16>,
    %c1_87 = arith.constant 1 : index
    %c0_88 = arith.constant 0 : index
    %c0_89 = arith.constant 0 : index
    %91 = vector.load %arg3[%c1_87, %c0_88, %c0_89] : memref<3x8x72xbf16, #tpu.memory_space<vmem>>, vector<1x8x72xbf16>
    %92 = vector.shape_cast %91 : vector<1x8x72xbf16> to vector<8x72xbf16>
    %c0_90 = arith.constant 0 : index
    %c0_91 = arith.constant 0 : index
    %93 = vector.load %arg5[%c0_90, %c0_91] : memref<72x128xbf16, #tpu.memory_space<vmem>>, vector<72x128xbf16>
    %cst_92 = arith.constant dense<0.000000e+00> : vector<8x128xf32>
    %94 = tpu.matmul %92, %93, %cst_92 {dimension_numbers = #tpu.dot_dimension_numbers<[1], [0], [0], [1], [0, 0, 1, 1], [], []>} : vector<8x72xbf16>, vector<72x128xbf16>, vector<8x128xf32> -> vector<8x128xf32>
    %c0_93 = arith.constant 0 : index
    %c1_94 = arith.constant 1 : index
    %c0_95 = arith.constant 0 : index
    %c0_96 = arith.constant 0 : index
    %95 = vector.load %arg4[%c0_93, %c1_94, %c0_95, %c0_96] : memref<1x2x8x128xf32, #tpu.memory_space<vmem>>, vector<1x1x8x128xf32>
    %96 = vector.shape_cast %95 : vector<1x1x8x128xf32> to vector<8x128xf32>
    %97 = arith.addf %96, %94 : vector<8x128xf32>
    %c0_97 = arith.constant 0 : index
    %c1_98 = arith.constant 1 : index
    %c0_99 = arith.constant 0 : index
    %c0_100 = arith.constant 0 : index
    %98 = vector.load %arg4[%c0_97, %c1_98, %c0_99, %c0_100] : memref<1x2x8x128xf32, #tpu.memory_space<vmem>>, vector<1x1x8x128xf32>
    %99 = vector.shape_cast %98 : vector<1x1x8x128xf32> to vector<8x128xf32>
    %100 = vector.shape_cast %97 : vector<8x128xf32> to vector<1x1x8x128xf32>
    tpu.vector_store %arg4[%c0_97, %c1_98, %c0_99, %c0_100], %100 {strides = array<i32>} : memref<1x2x8x128xf32, #tpu.memory_space<vmem>>, vector<1x1x8x128xf32>,
    %c2 = arith.constant 2 : index
    %c0_101 = arith.constant 0 : index
    %c0_102 = arith.constant 0 : index
    %101 = vector.load %arg3[%c2, %c0_101, %c0_102] : memref<3x8x72xbf16, #tpu.memory_space<vmem>>, vector<1x8x72xbf16>
    %102 = vector.shape_cast %101 : vector<1x8x72xbf16> to vector<8x72xbf16>
    %c0_103 = arith.constant 0 : index
    %c0_104 = arith.constant 0 : index
    %103 = vector.load %arg5[%c0_103, %c0_104] : memref<72x128xbf16, #tpu.memory_space<vmem>>, vector<72x128xbf16>
    %cst_105 = arith.constant dense<0.000000e+00> : vector<8x128xf32>
    %104 = tpu.matmul %102, %103, %cst_105 {dimension_numbers = #tpu.dot_dimension_numbers<[1], [0], [0], [1], [0, 0, 1, 1], [], []>} : vector<8x72xbf16>, vector<72x128xbf16>, vector<8x128xf32> -> vector<8x128xf32>
    %c0_106 = arith.constant 0 : index
    %c0_107 = arith.constant 0 : index
    %c0_108 = arith.constant 0 : index
    %c0_109 = arith.constant 0 : index
    %105 = vector.load %arg4[%c0_106, %c0_107, %c0_108, %c0_109] : memref<1x2x8x128xf32, #tpu.memory_space<vmem>>, vector<1x1x8x128xf32>
    %106 = vector.shape_cast %105 : vector<1x1x8x128xf32> to vector<8x128xf32>
    %107 = arith.addf %106, %104 : vector<8x128xf32>
    %c0_110 = arith.constant 0 : index
    %c0_111 = arith.constant 0 : index
    %c0_112 = arith.constant 0 : index
    %c0_113 = arith.constant 0 : index
    %108 = vector.load %arg4[%c0_110, %c0_111, %c0_112, %c0_113] : memref<1x2x8x128xf32, #tpu.memory_space<vmem>>, vector<1x1x8x128xf32>
    %109 = vector.shape_cast %108 : vector<1x1x8x128xf32> to vector<8x128xf32>
    %110 = vector.shape_cast %107 : vector<8x128xf32> to vector<1x1x8x128xf32>
    tpu.vector_store %arg4[%c0_110, %c0_111, %c0_112, %c0_113], %110 {strides = array<i32>} : memref<1x2x8x128xf32, #tpu.memory_space<vmem>>, vector<1x1x8x128xf32>,
    %c3_i32 = arith.constant 3 : i32
    %111 = arith.addi %0, %c3_i32 : i32
    %c0_114 = arith.constant 0 : index
    %112 = arith.index_cast %111 : i32 to index
    %c0_115 = arith.constant 0 : index
    %c0_116 = arith.constant 0 : index
    %113 = vector.load %arg2[%c0_114, %112, %c0_115, %c0_116] : memref<1x6x8x256xbf16, #tpu.memory_space<vmem>>, vector<1x1x8x256xbf16>
    %114 = vector.shape_cast %113 : vector<1x1x8x256xbf16> to vector<8x256xbf16>
    %115 = vector.extract_strided_slice %114 {offsets = [0, 0], sizes = [8, 128], strides = [1, 1]} : vector<8x256xbf16> to vector<8x128xbf16>
    %c0_117 = arith.constant 0 : index
    %c0_118 = arith.constant 0 : index
    %116 = vector.load %arg5[%c0_117, %c0_118] : memref<72x128xbf16, #tpu.memory_space<vmem>>, vector<8x128xbf16>
    tpu.vector_store %arg5[%c0_117, %c0_118], %115 {strides = array<i32>} : memref<72x128xbf16, #tpu.memory_space<vmem>>, vector<8x128xbf16>,
    %117 = vector.extract_strided_slice %114 {offsets = [0, 1], sizes = [8, 128], strides = [1, 1]} : vector<8x256xbf16> to vector<8x128xbf16>
    %c8_119 = arith.constant 8 : index
    %c0_120 = arith.constant 0 : index
    %118 = vector.load %arg5[%c8_119, %c0_120] : memref<72x128xbf16, #tpu.memory_space<vmem>>, vector<8x128xbf16>
    tpu.vector_store %arg5[%c8_119, %c0_120], %117 {strides = array<i32>} : memref<72x128xbf16, #tpu.memory_space<vmem>>, vector<8x128xbf16>,
    %119 = vector.extract_strided_slice %114 {offsets = [0, 2], sizes = [8, 128], strides = [1, 1]} : vector<8x256xbf16> to vector<8x128xbf16>
    %c16_121 = arith.constant 16 : index
    %c0_122 = arith.constant 0 : index
    %120 = vector.load %arg5[%c16_121, %c0_122] : memref<72x128xbf16, #tpu.memory_space<vmem>>, vector<8x128xbf16>
    tpu.vector_store %arg5[%c16_121, %c0_122], %119 {strides = array<i32>} : memref<72x128xbf16, #tpu.memory_space<vmem>>, vector<8x128xbf16>,
    %121 = vector.extract_strided_slice %114 {offsets = [0, 12], sizes = [8, 128], strides = [1, 1]} : vector<8x256xbf16> to vector<8x128xbf16>
    %c24_123 = arith.constant 24 : index
    %c0_124 = arith.constant 0 : index
    %122 = vector.load %arg5[%c24_123, %c0_124] : memref<72x128xbf16, #tpu.memory_space<vmem>>, vector<8x128xbf16>
    tpu.vector_store %arg5[%c24_123, %c0_124], %121 {strides = array<i32>} : memref<72x128xbf16, #tpu.memory_space<vmem>>, vector<8x128xbf16>,
    %123 = vector.extract_strided_slice %114 {offsets = [0, 13], sizes = [8, 128], strides = [1, 1]} : vector<8x256xbf16> to vector<8x128xbf16>
    %c32_125 = arith.constant 32 : index
    %c0_126 = arith.constant 0 : index
    %124 = vector.load %arg5[%c32_125, %c0_126] : memref<72x128xbf16, #tpu.memory_space<vmem>>, vector<8x128xbf16>
    tpu.vector_store %arg5[%c32_125, %c0_126], %123 {strides = array<i32>} : memref<72x128xbf16, #tpu.memory_space<vmem>>, vector<8x128xbf16>,
    %125 = vector.extract_strided_slice %114 {offsets = [0, 14], sizes = [8, 128], strides = [1, 1]} : vector<8x256xbf16> to vector<8x128xbf16>
    %c40_127 = arith.constant 40 : index
    %c0_128 = arith.constant 0 : index
    %126 = vector.load %arg5[%c40_127, %c0_128] : memref<72x128xbf16, #tpu.memory_space<vmem>>, vector<8x128xbf16>
    tpu.vector_store %arg5[%c40_127, %c0_128], %125 {strides = array<i32>} : memref<72x128xbf16, #tpu.memory_space<vmem>>, vector<8x128xbf16>,
    %127 = vector.extract_strided_slice %114 {offsets = [0, 24], sizes = [8, 128], strides = [1, 1]} : vector<8x256xbf16> to vector<8x128xbf16>
    %c48_129 = arith.constant 48 : index
    %c0_130 = arith.constant 0 : index
    %128 = vector.load %arg5[%c48_129, %c0_130] : memref<72x128xbf16, #tpu.memory_space<vmem>>, vector<8x128xbf16>
    tpu.vector_store %arg5[%c48_129, %c0_130], %127 {strides = array<i32>} : memref<72x128xbf16, #tpu.memory_space<vmem>>, vector<8x128xbf16>,
    %129 = vector.extract_strided_slice %114 {offsets = [0, 25], sizes = [8, 128], strides = [1, 1]} : vector<8x256xbf16> to vector<8x128xbf16>
    %c56_131 = arith.constant 56 : index
    %c0_132 = arith.constant 0 : index
    %130 = vector.load %arg5[%c56_131, %c0_132] : memref<72x128xbf16, #tpu.memory_space<vmem>>, vector<8x128xbf16>
    tpu.vector_store %arg5[%c56_131, %c0_132], %129 {strides = array<i32>} : memref<72x128xbf16, #tpu.memory_space<vmem>>, vector<8x128xbf16>,
    %131 = vector.extract_strided_slice %114 {offsets = [0, 26], sizes = [8, 128], strides = [1, 1]} : vector<8x256xbf16> to vector<8x128xbf16>
    %c64_133 = arith.constant 64 : index
    %c0_134 = arith.constant 0 : index
    %132 = vector.load %arg5[%c64_133, %c0_134] : memref<72x128xbf16, #tpu.memory_space<vmem>>, vector<8x128xbf16>
    tpu.vector_store %arg5[%c64_133, %c0_134], %131 {strides = array<i32>} : memref<72x128xbf16, #tpu.memory_space<vmem>>, vector<8x128xbf16>,
    %c2_135 = arith.constant 2 : index
    %c0_136 = arith.constant 0 : index
    %c0_137 = arith.constant 0 : index
    %133 = vector.load %arg3[%c2_135, %c0_136, %c0_137] : memref<3x8x72xbf16, #tpu.memory_space<vmem>>, vector<1x8x72xbf16>
    %134 = vector.shape_cast %133 : vector<1x8x72xbf16> to vector<8x72xbf16>
    %c0_138 = arith.constant 0 : index
    %c0_139 = arith.constant 0 : index
    %135 = vector.load %arg5[%c0_138, %c0_139] : memref<72x128xbf16, #tpu.memory_space<vmem>>, vector<72x128xbf16>
    %cst_140 = arith.constant dense<0.000000e+00> : vector<8x128xf32>
    %136 = tpu.matmul %134, %135, %cst_140 {dimension_numbers = #tpu.dot_dimension_numbers<[1], [0], [0], [1], [0, 0, 1, 1], [], []>} : vector<8x72xbf16>, vector<72x128xbf16>, vector<8x128xf32> -> vector<8x128xf32>
    %c0_141 = arith.constant 0 : index
    %c1_142 = arith.constant 1 : index
    %c0_143 = arith.constant 0 : index
    %c0_144 = arith.constant 0 : index
    %137 = vector.load %arg4[%c0_141, %c1_142, %c0_143, %c0_144] : memref<1x2x8x128xf32, #tpu.memory_space<vmem>>, vector<1x1x8x128xf32>
    %138 = vector.shape_cast %137 : vector<1x1x8x128xf32> to vector<8x128xf32>
    %139 = arith.addf %138, %136 : vector<8x128xf32>
    %c0_145 = arith.constant 0 : index
    %c1_146 = arith.constant 1 : index
    %c0_147 = arith.constant 0 : index
    %c0_148 = arith.constant 0 : index
    %140 = vector.load %arg4[%c0_145, %c1_146, %c0_147, %c0_148] : memref<1x2x8x128xf32, #tpu.memory_space<vmem>>, vector<1x1x8x128xf32>
    %141 = vector.shape_cast %140 : vector<1x1x8x128xf32> to vector<8x128xf32>
    %142 = vector.shape_cast %139 : vector<8x128xf32> to vector<1x1x8x128xf32>
    tpu.vector_store %arg4[%c0_145, %c1_146, %c0_147, %c0_148], %142 {strides = array<i32>} : memref<1x2x8x128xf32, #tpu.memory_space<vmem>>, vector<1x1x8x128xf32>,
    return
  }
  func.func @transform_0(%arg0: i32, %arg1: i32) -> (i32, i32, i32, i32) {
    %c0_i32 = arith.constant 0 : i32
    %c0_i32_0 = arith.constant 0 : i32
    %c0_i32_1 = arith.constant 0 : i32
    %c0_i32_2 = arith.constant 0 : i32
    return %arg0, %c0_i32, %c0_i32_0, %c0_i32_1 : i32, i32, i32, i32
  }
  func.func @transform_1(%arg0: i32, %arg1: i32) -> (i32, i32, i32) {
    %c0_i32 = arith.constant 0 : i32
    %c0_i32_0 = arith.constant 0 : i32
    %c0_i32_1 = arith.constant 0 : i32
    %c0_i32_2 = arith.constant 0 : i32
    return %c0_i32, %c0_i32_0, %c0_i32_1 : i32, i32, i32
  }
  func.func @transform_2(%arg0: i32, %arg1: i32) -> (i32, i32, i32, i32) {
    %c0_i32 = arith.constant 0 : i32
    %c0_i32_0 = arith.constant 0 : i32
    %c0_i32_1 = arith.constant 0 : i32
    return %arg0, %arg1, %c0_i32, %c0_i32_0 : i32, i32, i32, i32
  }
}

</mosaic_0001>

<llo_original>
// kernel: tpu_custom_call.1
$region0: #{tpu_custom_call.1}
  #allocation0 [shape = 'u32[]', space=smem, size = 0x4, offset = 0x4, fixed_abs, tag = 'smem constant byte address 0x4 - core index']
  #allocation1 [shape = 'u32[72,128]{1,0:T(1,128)}', space=vmem, size = 0x9000, scoped, tag = 'internal scratch']
  #allocation2 [shape = 'bf16[72,128]{1,0:T(8,128)(2,1)}', space=vmem, size = 0x4800, scoped, tag = 'scratch operand']
  %s0 = inlined_call_operand.hbm [shape: bf16[2,6,8,256], index: 0, kind: input, shape index: {}]
  %s1 = inlined_call_operand.hbm [shape: bf16[3,8,72], index: 1, kind: input, shape index: {}]
  %s2 = inlined_call_operand.hbm [shape: f32[2,4,8,128], index: 2, kind: output, shape index: {}]
  %s3 = sld [smem:[#allocation0]]
  $region49: #{tpu_custom_call.1} parent=0
    _
  %s5 = ssub.s32 1, %s3
  %s6 = scalar_select 0, %s5, %s3
  $region1: #{tpu_custom_call.1} parent=0
    #allocation3 [shape = 'u8[49152]{0}', space=vmem, size = 0xc000, scoped, tag = 'input window, operand 0']
    #allocation4 [shape = 's32[2]{0}', space=sflag, size = 0x8, scoped, tag = 'scoped memory for tpu_custom_call.1']
    #allocation5 [shape = 's32[2]{0}', space=sflag, size = 0x8, scoped, tag = 'scoped memory for tpu_custom_call.1']
    #allocation6 [shape = 'u8[6144]{0}', space=vmem, size = 0x1800, scoped, tag = 'input window, operand 1, single buffered']
    #allocation7 [shape = 's32[1]{0}', space=sflag, size = 0x4, scoped, tag = 'scoped memory for tpu_custom_call.1']
    #allocation8 [shape = 'u8[16384]{0}', space=vmem, size = 0x4000, scoped, tag = 'output window, operand 0']
    %7 = vsyncpa [#allocation4], 0
    %s8 = scalar_lea.sflag [#allocation4], 1
    %9 = vsyncpa %s8, 0
    %10 = vsyncpa [#allocation7], 0
    %11 = vsyncpa [#allocation5], 0
    %s12 = scalar_lea.sflag [#allocation5], 1
    %13 = vsyncpa %s12, 0
    loop: start=0, step=1, limit=6
    $region2: #{tpu_custom_call.1} parent=1 // loop_pre_header
      _
    $region3: #{tpu_custom_call.1} parent=1 // loop_header
      %s15 = sphi 0, %s19
      %p16 = scmp.ge.s32.totalorder %s15, 6
      %s22 = sphi 0, %s34
      %s23 = sphi 0, %s30
      %s24 = sphi 0, %s22
      %s25 = sphi 0, %s23
      %s26 = sphi 0, %s24
      %s27 = sphi 0, %s25
      %s37 = sphi 0, %s39
      %s40 = sphi 0, %s37
      %s41 = sphi 0, %s40
      %s57 = sphi 0, %s41
      %s61 = sphi 0, %s61
      %s63 = sphi 0, %s61
      %s64 = sphi 0, %s63
      %s78 = sphi 0, %s64
      %s86 = sphi 0, %s88
      %s89 = sphi 0, %s86
      %s90 = sphi 0, %s89
      %s106 = sphi 0, %s90
    $region4: #{tpu_custom_call.1} parent=1 // loop_header_branch
      %18 = sbr.rel (%p16) target = $region8
    $region5: #{tpu_custom_call.1} parent=1 // loop_body
      %s20 = ssub.s32 %s15, 1
      %s21 = ssub.s32 %s15, 2
      %s28 = sadd.s32 1, %s23
      %p29 = scmp.ge.s32.totalorder %s28, 2
      %s30 = scalar_select %p29, 0, %s28
      %s31 = sadd.s32 1, %s22
      %s32 = scalar_select %p29, %s31, %s22
      %p33 = scmp.ge.s32.totalorder %s32, 2
      %s34 = scalar_select %p33, 0, %s32
      %s35 = ssub.s32 %s22, %s34
      %p36 = scmp.eq.s32.totalorder %s35, 0
      %s38 = sadd.s32 %s37, 1
      %s39 = scalar_select %p36, %s37, %s38
      %p42 = pneg %p36
      %p43 = scmp.eq.s32.totalorder %s15, 3
      %p44 = por %p42, %p43
      %p45 = scmp.ne.s32.totalorder %s37, %s40
      %p46 = scmp.eq.s32.totalorder %s15, 0
      %p47 = por %p45, %p46
      %p48 = scmp.ne.s32.totalorder %s37, %s40
      %p49 = scmp.eq.s32.totalorder %s20, 3
      %p50 = por %p48, %p49
      %p51 = scmp.ne.s32.totalorder %s40, %s41
      %p52 = scmp.eq.s32.totalorder %s20, 0
      %p53 = por %p51, %p52
      %p54 = scmp.ne.s32.totalorder %s40, %s41
      %p55 = scmp.eq.s32.totalorder %s21, 3
      %p56 = por %p54, %p55
      %p58 = scmp.ne.s32.totalorder %s41, %s57
      %p59 = scmp.eq.s32.totalorder %s21, 0
      %p60 = por %p58, %p59
      %s62 = sadd.s32 %s61, 1
      %p65 = scmp.eq.s32.totalorder %s15, 3
      %p66 = scmp.ne.s32.totalorder %s61, %s63
      %p67 = scmp.eq.s32.totalorder %s15, 0
      %p68 = por %p66, %p67
      %p69 = scmp.ne.s32.totalorder %s61, %s63
      %p70 = scmp.eq.s32.totalorder %s20, 3
      %p71 = por %p69, %p70
      %p72 = scmp.ne.s32.totalorder %s63, %s64
      %p73 = scmp.eq.s32.totalorder %s20, 0
      %p74 = por %p72, %p73
      %p75 = scmp.ne.s32.totalorder %s63, %s64
      %p76 = scmp.eq.s32.totalorder %s21, 3
      %p77 = por %p75, %p76
      %p79 = scmp.ne.s32.totalorder %s64, %s78
      %p80 = scmp.eq.s32.totalorder %s21, 0
      %p81 = por %p79, %p80
      %s82 = ssub.s32 %s22, %s34
      %s83 = ssub.s32 %s23, %s30
      %s84 = sor.u32 %s82, %s83
      %p85 = scmp.eq.s32.totalorder %s84, 0
      %s87 = sadd.s32 %s86, 1
      %s88 = scalar_select %p85, %s86, %s87
      %p91 = pneg %p85
      %p92 = scmp.eq.s32.totalorder %s15, 3
      %p93 = por %p91, %p92
      %p94 = scmp.ne.s32.totalorder %s86, %s89
      %p95 = scmp.eq.s32.totalorder %s15, 0
      %p96 = por %p94, %p95
      %p97 = scmp.ne.s32.totalorder %s86, %s89
      %p98 = scmp.eq.s32.totalorder %s20, 3
      %p99 = por %p97, %p98
      %p100 = scmp.ne.s32.totalorder %s89, %s90
      %p101 = scmp.eq.s32.totalorder %s20, 0
      %p102 = por %p100, %p101
      %p103 = scmp.ne.s32.totalorder %s89, %s90
      %p104 = scmp.eq.s32.totalorder %s21, 3
      %p105 = por %p103, %p104
      %p107 = scmp.ne.s32.totalorder %s90, %s106
      %p108 = scmp.eq.s32.totalorder %s21, 0
      %p109 = por %p107, %p108
      %p110 = scmp.le.s32.totalorder 1, %s15
      %p111 = scmp.lt.s32.totalorder %s15, 5
      %p112 = pnand %p110, %p111
      %p113 = pneg %p112
      // Predicated region
      $region9: #{tpu_custom_call.1} parent=5 // pred_check
        _
      $region10: #{tpu_custom_call.1} parent=5 // pred_check_branch
        %115 = sbr.rel (%p112) target = $region12
      $region11: #{tpu_custom_call.1} parent=5 // pred_region
        %s116 = ssub.s32 %s15, 1
        // Predicated region
        $region13: #{tpu_custom_call.1} parent=11 // pred_check
          %p117 = pneg %p74
        $region14: #{tpu_custom_call.1} parent=11 // pred_check_branch
          %119 = sbr.rel (%p117) target = $region16
        $region15: #{tpu_custom_call.1} parent=11 // pred_region
          %121 = vsyncadd [#allocation7], 0
          %s122 = sshll.u32 %s1, 4
          %s123 = int_to_ptr.hbm [resolvable:$true] %s122
          %s124 = sshll.u32 [#allocation6], 4
          %s125 = int_to_ptr.vmem [resolvable:$true] %s124
          %130 = dma.hbm_to_vmem [thread:$0]  %s123, 192, %s125, [#allocation7], 64, 64, 4
        $region16: #{tpu_custom_call.1} parent=11 // pred_fallthru
          _
      $region12: #{tpu_custom_call.1} parent=5 // pred_fallthru
        _
      %p131 = scmp.lt.s32.totalorder %s15, 4
      // Predicated region
      $region17: #{tpu_custom_call.1} parent=5 // pred_check
        %p132 = pneg %p131
      $region18: #{tpu_custom_call.1} parent=5 // pred_check_branch
        %134 = sbr.rel (%p132) target = $region20
      $region19: #{tpu_custom_call.1} parent=5 // pred_region
        // Predicated region
        $region21: #{tpu_custom_call.1} parent=19 // pred_check
          %p135 = pneg %p47
        $region22: #{tpu_custom_call.1} parent=19 // pred_check_branch
          %137 = sbr.rel (%p135) target = $region24
        $region23: #{tpu_custom_call.1} parent=19 // pred_region
          %s138 = sand.u32 %s37, 1
          %s139 = scalar_lea.sflag [#allocation4], %s138
          %s140 = sand.u32 %s37, 1
          %s141 = smul.addr %s140, 48
          %s142 = scalar_lea.vmem [#allocation3], %s141
          %144 = vsyncadd %s139, 0
          %s145 = smul.addr %s22, 12
          %s146 = smul.addr %s145, 4
          %s147 = scalar_lea.hbm %s0, %s146
          %s148 = sshll.u32 %s147, 4
          %s149 = int_to_ptr.hbm [resolvable:$true] %s148
          %s150 = sshll.u32 %s142, 4
          %s151 = int_to_ptr.vmem [resolvable:$true] %s150
          %156 = dma.hbm_to_vmem [thread:$0]  %s149, 768, %s151, %s139, 128, 128, 8
        $region24: #{tpu_custom_call.1} parent=19 // pred_fallthru
          _
      $region20: #{tpu_custom_call.1} parent=5 // pred_fallthru
        _
      %p157 = scmp.le.s32.totalorder 1, %s15
      %p158 = scmp.lt.s32.totalorder %s15, 5
      %p159 = pnand %p157, %p158
      %p160 = pneg %p159
      // Predicated region
      $region25: #{tpu_custom_call.1} parent=5 // pred_check
        _
      $region26: #{tpu_custom_call.1} parent=5 // pred_check_branch
        %162 = sbr.rel (%p159) target = $region28
      $region27: #{tpu_custom_call.1} parent=5 // pred_region
        %s163 = ssub.s32 %s15, 1
        %s164 = sand.u32 %s40, 1
        %s165 = scalar_lea.sflag [#allocation4], %s164
        %s166 = sand.u32 %s40, 1
        %s167 = smul.addr %s166, 48
        %s168 = scalar_lea.vmem [#allocation3], %s167
        // Predicated region
        $region29: #{tpu_custom_call.1} parent=27 // pred_check
          %p169 = pneg %p53
        $region30: #{tpu_custom_call.1} parent=27 // pred_check_branch
          %171 = sbr.rel (%p169) target = $region32
        $region31: #{tpu_custom_call.1} parent=27 // pred_region
          %173 = dma.done %s165, 768
        $region32: #{tpu_custom_call.1} parent=27 // pred_fallthru
          _
        // Predicated region
        $region33: #{tpu_custom_call.1} parent=27 // pred_check
          %p174 = pneg %p74
        $region34: #{tpu_custom_call.1} parent=27 // pred_check_branch
          %176 = sbr.rel (%p174) target = $region36
        $region35: #{tpu_custom_call.1} parent=27 // pred_region
          %178 = dma.done [#allocation7], 192
        $region36: #{tpu_custom_call.1} parent=27 // pred_fallthru
          _
        %s179 = sand.u32 %s40, 1
        %s180 = scalar_lea.sflag [#allocation4], %s179
        %s181 = sand.u32 %s40, 1
        %s182 = smul.addr %s181, 48
        %s183 = scalar_lea.vmem [#allocation3], %s182
        %p184 = pneg %p53
        %p185 = pneg %p50
        %p186 = pneg %p74
        %p187 = pneg %p71
        %p188 = pneg %p102
        %p189 = pneg %p99
        %s190 = sand.u32 %s89, 1
        %s191 = scalar_lea.sflag [#allocation5], %s190
        %s192 = sand.u32 %s89, 1
        %s193 = smul.addr %s192, 16
        %s194 = scalar_lea.vmem [#allocation8], %s193
        %s195 = smul.u32 2, %s25
        %s197 = smul.u32 %s25, 2
        %s198 = smul.u32 %s197, 2
        %s199 = smul.addr %s198, 4
        %s200 = scalar_lea.vmem %s168, %s199 [#allocation3]
        %v201 = vld [vmem:[%s200] sm:$0xff]
        %202 = vst [vmem:[#allocation2] sm:$0xf] %v201
        %204 = vrot.lane.b32.xlu0 %v201, 127
        %v205 = vpop.permute.xlu0 %204
        %v206 = vrot.slane %v205, 4
        %vm207 = vcmask 1039360
        %v208 = vsel %vm207, %v205, %v206
        %210 = vst [vmem:[#allocation2 + $0x4] sm:$0xf] %v208
        %211 = vrot.lane.b32.xlu0 %v201, 126
        %v212 = vpop.permute.xlu0 %211
        %v213 = vrot.slane %v212, 4
        %vm214 = vcmask 1031168
        %v215 = vsel %vm214, %v212, %v213
        %217 = vst [vmem:[#allocation2 + $0x8] sm:$0xf] %v215
        %218 = vrot.lane.b32.xlu0 %v201, 116
        %v219 = vpop.permute.xlu0 %218
        %v220 = vrot.slane %v219, 4
        %vm221 = vcmask 949248
        %v222 = vsel %vm221, %v219, %v220
        %224 = vst [vmem:[#allocation2 + $0xc] sm:$0xf] %v222
        %225 = vrot.lane.b32.xlu0 %v201, 115
        %v226 = vpop.permute.xlu0 %225
        %v227 = vrot.slane %v226, 4
        %vm228 = vcmask 941056
        %v229 = vsel %vm228, %v226, %v227
        %231 = vst [vmem:[#allocation2 + $0x10] sm:$0xf] %v229
        %232 = vrot.lane.b32.xlu0 %v201, 114
        %v233 = vpop.permute.xlu0 %232
        %v234 = vrot.slane %v233, 4
        %vm235 = vcmask 932864
        %v236 = vsel %vm235, %v233, %v234
        %238 = vst [vmem:[#allocation2 + $0x14] sm:$0xf] %v236
        %239 = vrot.lane.b32.xlu0 %v201, 104
        %v240 = vpop.permute.xlu0 %239
        %v241 = vrot.slane %v240, 4
        %vm242 = vcmask 850944
        %v243 = vsel %vm242, %v240, %v241
        %245 = vst [vmem:[#allocation2 + $0x18] sm:$0xf] %v243
        %246 = vrot.lane.b32.xlu0 %v201, 103
        %v247 = vpop.permute.xlu0 %246
        %v248 = vrot.slane %v247, 4
        %vm249 = vcmask 842752
        %v250 = vsel %vm249, %v247, %v248
        %252 = vst [vmem:[#allocation2 + $0x1c] sm:$0xf] %v250
        %253 = vrot.lane.b32.xlu0 %v201, 102
        %v254 = vpop.permute.xlu0 %253
        %v255 = vrot.slane %v254, 4
        %vm256 = vcmask 834560
        %v257 = vsel %vm256, %v254, %v255
        %259 = vst [vmem:[#allocation2 + $0x20] sm:$0xf] %v257
        %v260 = vld [vmem:[#allocation6] sm:$0xf]
        %v261 = vld [vmem:[#allocation2] sm:$0xf]
        %v262 = vld [vmem:[#allocation2 + $0x4] sm:$0xf]
        %v263 = vld [vmem:[#allocation2 + $0x8] sm:$0xf]
        %v264 = vld [vmem:[#allocation2 + $0xc] sm:$0xf]
        %v265 = vld [vmem:[#allocation2 + $0x10] sm:$0xf]
        %v266 = vld [vmem:[#allocation2 + $0x14] sm:$0xf]
        %v267 = vld [vmem:[#allocation2 + $0x18] sm:$0xf]
        %v268 = vld [vmem:[#allocation2 + $0x1c] sm:$0xf]
        %v269 = vld [vmem:[#allocation2 + $0x20] sm:$0xf]
        %v279 = vunpack.c.l.b16 %v261
        %v280 = vunpack.c.l.b16 %v262
        %v281 = vunpack.c.l.b16 %v263
        %v282 = vunpack.c.l.b16 %v264
        %v283 = vunpack.c.l.b16 %v265
        %v284 = vunpack.c.l.b16 %v266
        %v285 = vunpack.c.l.b16 %v267
        %v286 = vunpack.c.l.b16 %v268
        %v287 = vunpack.c.l.b16 %v269
        %v288 = vpack.c.b16 %v280, %v279
        %v289 = vpack.c.b16 %v282, %v281
        %v290 = vpack.c.b16 %v284, %v283
        %v291 = vpack.c.b16 %v286, %v285
        %v292 = vpack.c.b16 %v287, %v287
        %vm297 = vcmask 588800
        %v299 = vsel %vm297, %v260, 0
        %vm301 = vcmask 1043456
        %v303 = vsel %vm301, %v292, 0
        %305 = vmatpush.bf16.msra.mxu0 0
        %306 = vmatpush.bf16.msra.mxu0 0
        %307 = vmatpush.bf16.msra.mxu0 0
        %308 = vmatpush.bf16.msra.mxu0 %v303
        %309 = vmatpush.bf16.msra.mxu0 %v291
        %310 = vmatpush.bf16.msra.mxu0 %v290
        %311 = vmatpush.bf16.msra.mxu0 %v289
        %312 = vmatpush.bf16.msra.mxu0 %v288
        %313 = vmatmul.bf16.gmra.mxu0 %v299
        %v314 = vpop.f32.mrf.mxu0
        %v315 = vadd.f32 0.0, %v314
        %v316 = vpop.f32.mrf.mxu0
        %317 = vdwg.mxu0
        %318 = vst [vmem:[%s194] sm:$0xff] %v315
        %s319 = sadd.s32 %s197, 1
        %s320 = smul.u32 %s319, 2
        %s321 = smul.addr %s320, 4
        %s322 = scalar_lea.vmem %s168, %s321 [#allocation3]
        %v323 = vld [vmem:[%s322] sm:$0xff]
        %324 = vst [vmem:[#allocation2] sm:$0xf] %v323
        %326 = vrot.lane.b32.xlu0 %v323, 127
        %v327 = vpop.permute.xlu0 %326
        %v328 = vrot.slane %v327, 4
        %v329 = vsel %vm207, %v327, %v328
        %331 = vst [vmem:[#allocation2 + $0x4] sm:$0xf] %v329
        %332 = vrot.lane.b32.xlu0 %v323, 126
        %v333 = vpop.permute.xlu0 %332
        %v334 = vrot.slane %v333, 4
        %v335 = vsel %vm214, %v333, %v334
        %337 = vst [vmem:[#allocation2 + $0x8] sm:$0xf] %v335
        %338 = vrot.lane.b32.xlu0 %v323, 116
        %v339 = vpop.permute.xlu0 %338
        %v340 = vrot.slane %v339, 4
        %v341 = vsel %vm221, %v339, %v340
        %343 = vst [vmem:[#allocation2 + $0xc] sm:$0xf] %v341
        %344 = vrot.lane.b32.xlu0 %v323, 115
        %v345 = vpop.permute.xlu0 %344
        %v346 = vrot.slane %v345, 4
        %v347 = vsel %vm228, %v345, %v346
        %349 = vst [vmem:[#allocation2 + $0x10] sm:$0xf] %v347
        %350 = vrot.lane.b32.xlu0 %v323, 114
        %v351 = vpop.permute.xlu0 %350
        %v352 = vrot.slane %v351, 4
        %v353 = vsel %vm235, %v351, %v352
        %355 = vst [vmem:[#allocation2 + $0x14] sm:$0xf] %v353
        %356 = vrot.lane.b32.xlu0 %v323, 104
        %v357 = vpop.permute.xlu0 %356
        %v358 = vrot.slane %v357, 4
        %v359 = vsel %vm242, %v357, %v358
        %361 = vst [vmem:[#allocation2 + $0x18] sm:$0xf] %v359
        %362 = vrot.lane.b32.xlu0 %v323, 103
        %v363 = vpop.permute.xlu0 %362
        %v364 = vrot.slane %v363, 4
        %v365 = vsel %vm249, %v363, %v364
        %367 = vst [vmem:[#allocation2 + $0x1c] sm:$0xf] %v365
        %368 = vrot.lane.b32.xlu0 %v323, 102
        %v369 = vpop.permute.xlu0 %368
        %v370 = vrot.slane %v369, 4
        %v371 = vsel %vm256, %v369, %v370
        %373 = vst [vmem:[#allocation2 + $0x20] sm:$0xf] %v371
        %v374 = vld [vmem:[#allocation6] sm:$0xf]
        %v375 = vld [vmem:[#allocation2] sm:$0xf]
        %v376 = vld [vmem:[#allocation2 + $0x4] sm:$0xf]
        %v377 = vld [vmem:[#allocation2 + $0x8] sm:$0xf]
        %v378 = vld [vmem:[#allocation2 + $0xc] sm:$0xf]
        %v379 = vld [vmem:[#allocation2 + $0x10] sm:$0xf]
        %v380 = vld [vmem:[#allocation2 + $0x14] sm:$0xf]
        %v381 = vld [vmem:[#allocation2 + $0x18] sm:$0xf]
        %v382 = vld [vmem:[#allocation2 + $0x1c] sm:$0xf]
        %v383 = vld [vmem:[#allocation2 + $0x20] sm:$0xf]
        %v393 = vunpack.c.l.b16 %v375
        %v394 = vunpack.c.l.b16 %v376
        %v395 = vunpack.c.l.b16 %v377
        %v396 = vunpack.c.l.b16 %v378
        %v397 = vunpack.c.l.b16 %v379
        %v398 = vunpack.c.l.b16 %v380
        %v399 = vunpack.c.l.b16 %v381
        %v400 = vunpack.c.l.b16 %v382
        %v401 = vunpack.c.l.b16 %v383
        %v402 = vpack.c.b16 %v394, %v393
        %v403 = vpack.c.b16 %v396, %v395
        %v404 = vpack.c.b16 %v398, %v397
        %v405 = vpack.c.b16 %v400, %v399
        %v406 = vpack.c.b16 %v401, %v401
        %v412 = vsel %vm297, %v374, 0
        %v415 = vsel %vm301, %v406, 0
        %417 = vmatpush.bf16.msra.mxu0 0
        %418 = vmatpush.bf16.msra.mxu0 0
        %419 = vmatpush.bf16.msra.mxu0 0
        %420 = vmatpush.bf16.msra.mxu0 %v415
        %421 = vmatpush.bf16.msra.mxu0 %v405
        %422 = vmatpush.bf16.msra.mxu0 %v404
        %423 = vmatpush.bf16.msra.mxu0 %v403
        %424 = vmatpush.bf16.msra.mxu0 %v402
        %425 = vmatmul.bf16.gmra.mxu0 %v412
        %v426 = vpop.f32.mrf.mxu0
        %v427 = vadd.f32 0.0, %v426
        %v428 = vpop.f32.mrf.mxu0
        %429 = vdwg.mxu0
        %s430 = scalar_lea.vmem %s194, 8 [#allocation8]
        %431 = vst [vmem:[%s430] sm:$0xff] %v427
        %s432 = scalar_lea.vmem [#allocation6], 4
        %v433 = vld [vmem:[%s432] sm:$0xf]
        %v434 = vld [vmem:[#allocation2] sm:$0xf]
        %v435 = vld [vmem:[#allocation2 + $0x4] sm:$0xf]
        %v436 = vld [vmem:[#allocation2 + $0x8] sm:$0xf]
        %v437 = vld [vmem:[#allocation2 + $0xc] sm:$0xf]
        %v438 = vld [vmem:[#allocation2 + $0x10] sm:$0xf]
        %v439 = vld [vmem:[#allocation2 + $0x14] sm:$0xf]
        %v440 = vld [vmem:[#allocation2 + $0x18] sm:$0xf]
        %v441 = vld [vmem:[#allocation2 + $0x1c] sm:$0xf]
        %v442 = vld [vmem:[#allocation2 + $0x20] sm:$0xf]
        %v452 = vunpack.c.l.b16 %v434
        %v453 = vunpack.c.l.b16 %v435
        %v454 = vunpack.c.l.b16 %v436
        %v455 = vunpack.c.l.b16 %v437
        %v456 = vunpack.c.l.b16 %v438
        %v457 = vunpack.c.l.b16 %v439
        %v458 = vunpack.c.l.b16 %v440
        %v459 = vunpack.c.l.b16 %v441
        %v460 = vunpack.c.l.b16 %v442
        %v461 = vpack.c.b16 %v453, %v452
        %v462 = vpack.c.b16 %v455, %v454
        %v463 = vpack.c.b16 %v457, %v456
        %v464 = vpack.c.b16 %v459, %v458
        %v465 = vpack.c.b16 %v460, %v460
        %v471 = vsel %vm297, %v433, 0
        %v474 = vsel %vm301, %v465, 0
        %476 = vmatpush.bf16.msra.mxu0 0
        %477 = vmatpush.bf16.msra.mxu0 0
        %478 = vmatpush.bf16.msra.mxu0 0
        %479 = vmatpush.bf16.msra.mxu0 %v474
        %480 = vmatpush.bf16.msra.mxu0 %v464
        %481 = vmatpush.bf16.msra.mxu0 %v463
        %482 = vmatpush.bf16.msra.mxu0 %v462
        %483 = vmatpush.bf16.msra.mxu0 %v461
        %484 = vmatmul.bf16.gmra.mxu0 %v471
        %v485 = vpop.f32.mrf.mxu0
        %v486 = vadd.f32 0.0, %v485
        %v487 = vpop.f32.mrf.mxu0
        %488 = vdwg.mxu0
        %v489 = vld [vmem:[%s194] sm:$0xff]
        %v490 = vadd.f32 %v489, %v486
        %491 = vst [vmem:[%s194] sm:$0xff] %v490
        %s492 = sadd.s32 %s197, 2
        %s493 = smul.u32 %s492, 2
        %s494 = smul.addr %s493, 4
        %s495 = scalar_lea.vmem %s168, %s494 [#allocation3]
        %v496 = vld [vmem:[%s495] sm:$0xff]
        %497 = vst [vmem:[#allocation2] sm:$0xf] %v496
        %499 = vrot.lane.b32.xlu0 %v496, 127
        %v500 = vpop.permute.xlu0 %499
        %v501 = vrot.slane %v500, 4
        %v502 = vsel %vm207, %v500, %v501
        %504 = vst [vmem:[#allocation2 + $0x4] sm:$0xf] %v502
        %505 = vrot.lane.b32.xlu0 %v496, 126
        %v506 = vpop.permute.xlu0 %505
        %v507 = vrot.slane %v506, 4
        %v508 = vsel %vm214, %v506, %v507
        %510 = vst [vmem:[#allocation2 + $0x8] sm:$0xf] %v508
        %511 = vrot.lane.b32.xlu0 %v496, 116
        %v512 = vpop.permute.xlu0 %511
        %v513 = vrot.slane %v512, 4
        %v514 = vsel %vm221, %v512, %v513
        %516 = vst [vmem:[#allocation2 + $0xc] sm:$0xf] %v514
        %517 = vrot.lane.b32.xlu0 %v496, 115
        %v518 = vpop.permute.xlu0 %517
        %v519 = vrot.slane %v518, 4
        %v520 = vsel %vm228, %v518, %v519
        %522 = vst [vmem:[#allocation2 + $0x10] sm:$0xf] %v520
        %523 = vrot.lane.b32.xlu0 %v496, 114
        %v524 = vpop.permute.xlu0 %523
        %v525 = vrot.slane %v524, 4
        %v526 = vsel %vm235, %v524, %v525
        %528 = vst [vmem:[#allocation2 + $0x14] sm:$0xf] %v526
        %529 = vrot.lane.b32.xlu0 %v496, 104
        %v530 = vpop.permute.xlu0 %529
        %v531 = vrot.slane %v530, 4
        %v532 = vsel %vm242, %v530, %v531
        %534 = vst [vmem:[#allocation2 + $0x18] sm:$0xf] %v532
        %535 = vrot.lane.b32.xlu0 %v496, 103
        %v536 = vpop.permute.xlu0 %535
        %v537 = vrot.slane %v536, 4
        %v538 = vsel %vm249, %v536, %v537
        %540 = vst [vmem:[#allocation2 + $0x1c] sm:$0xf] %v538
        %541 = vrot.lane.b32.xlu0 %v496, 102
        %v542 = vpop.permute.xlu0 %541
        %v543 = vrot.slane %v542, 4
        %v544 = vsel %vm256, %v542, %v543
        %546 = vst [vmem:[#allocation2 + $0x20] sm:$0xf] %v544
        %v547 = vld [vmem:[%s432] sm:$0xf]
        %v548 = vld [vmem:[#allocation2] sm:$0xf]
        %v549 = vld [vmem:[#allocation2 + $0x4] sm:$0xf]
        %v550 = vld [vmem:[#allocation2 + $0x8] sm:$0xf]
        %v551 = vld [vmem:[#allocation2 + $0xc] sm:$0xf]
        %v552 = vld [vmem:[#allocation2 + $0x10] sm:$0xf]
        %v553 = vld [vmem:[#allocation2 + $0x14] sm:$0xf]
        %v554 = vld [vmem:[#allocation2 + $0x18] sm:$0xf]
        %v555 = vld [vmem:[#allocation2 + $0x1c] sm:$0xf]
        %v556 = vld [vmem:[#allocation2 + $0x20] sm:$0xf]
        %v566 = vunpack.c.l.b16 %v548
        %v567 = vunpack.c.l.b16 %v549
        %v568 = vunpack.c.l.b16 %v550
        %v569 = vunpack.c.l.b16 %v551
        %v570 = vunpack.c.l.b16 %v552
        %v571 = vunpack.c.l.b16 %v553
        %v572 = vunpack.c.l.b16 %v554
        %v573 = vunpack.c.l.b16 %v555
        %v574 = vunpack.c.l.b16 %v556
        %v575 = vpack.c.b16 %v567, %v566
        %v576 = vpack.c.b16 %v569, %v568
        %v577 = vpack.c.b16 %v571, %v570
        %v578 = vpack.c.b16 %v573, %v572
        %v579 = vpack.c.b16 %v574, %v574
        %v585 = vsel %vm297, %v547, 0
        %v588 = vsel %vm301, %v579, 0
        %590 = vmatpush.bf16.msra.mxu0 0
        %591 = vmatpush.bf16.msra.mxu0 0
        %592 = vmatpush.bf16.msra.mxu0 0
        %593 = vmatpush.bf16.msra.mxu0 %v588
        %594 = vmatpush.bf16.msra.mxu0 %v578
        %595 = vmatpush.bf16.msra.mxu0 %v577
        %596 = vmatpush.bf16.msra.mxu0 %v576
        %597 = vmatpush.bf16.msra.mxu0 %v575
        %598 = vmatmul.bf16.gmra.mxu0 %v585
        %v599 = vpop.f32.mrf.mxu0
        %v600 = vadd.f32 0.0, %v599
        %v601 = vpop.f32.mrf.mxu0
        %602 = vdwg.mxu0
        %v603 = vld [vmem:[%s430] sm:$0xff]
        %v604 = vadd.f32 %v603, %v600
        %605 = vst [vmem:[%s430] sm:$0xff] %v604
        %s606 = scalar_lea.vmem [#allocation6], 8
        %v607 = vld [vmem:[%s606] sm:$0xf]
        %v608 = vld [vmem:[#allocation2] sm:$0xf]
        %v609 = vld [vmem:[#allocation2 + $0x4] sm:$0xf]
        %v610 = vld [vmem:[#allocation2 + $0x8] sm:$0xf]
        %v611 = vld [vmem:[#allocation2 + $0xc] sm:$0xf]
        %v612 = vld [vmem:[#allocation2 + $0x10] sm:$0xf]
        %v613 = vld [vmem:[#allocation2 + $0x14] sm:$0xf]
        %v614 = vld [vmem:[#allocation2 + $0x18] sm:$0xf]
        %v615 = vld [vmem:[#allocation2 + $0x1c] sm:$0xf]
        %v616 = vld [vmem:[#allocation2 + $0x20] sm:$0xf]
        %v626 = vunpack.c.l.b16 %v608
        %v627 = vunpack.c.l.b16 %v609
        %v628 = vunpack.c.l.b16 %v610
        %v629 = vunpack.c.l.b16 %v611
        %v630 = vunpack.c.l.b16 %v612
        %v631 = vunpack.c.l.b16 %v613
        %v632 = vunpack.c.l.b16 %v614
        %v633 = vunpack.c.l.b16 %v615
        %v634 = vunpack.c.l.b16 %v616
        %v635 = vpack.c.b16 %v627, %v626
        %v636 = vpack.c.b16 %v629, %v628
        %v637 = vpack.c.b16 %v631, %v630
        %v638 = vpack.c.b16 %v633, %v632
        %v639 = vpack.c.b16 %v634, %v634
        %v645 = vsel %vm297, %v607, 0
        %v648 = vsel %vm301, %v639, 0
        %650 = vmatpush.bf16.msra.mxu0 0
        %651 = vmatpush.bf16.msra.mxu0 0
        %652 = vmatpush.bf16.msra.mxu0 0
        %653 = vmatpush.bf16.msra.mxu0 %v648
        %654 = vmatpush.bf16.msra.mxu0 %v638
        %655 = vmatpush.bf16.msra.mxu0 %v637
        %656 = vmatpush.bf16.msra.mxu0 %v636
        %657 = vmatpush.bf16.msra.mxu0 %v635
        %658 = vmatmul.bf16.gmra.mxu0 %v645
        %v659 = vpop.f32.mrf.mxu0
        %v660 = vadd.f32 0.0, %v659
        %v661 = vpop.f32.mrf.mxu0
        %662 = vdwg.mxu0
        %v663 = vld [vmem:[%s194] sm:$0xff]
        %v664 = vadd.f32 %v663, %v660
        %665 = vst [vmem:[%s194] sm:$0xff] %v664
        %s666 = sadd.s32 %s197, 3
        %s667 = smul.u32 %s666, 2
        %s668 = smul.addr %s667, 4
        %s669 = scalar_lea.vmem %s168, %s668 [#allocation3]
        %v670 = vld [vmem:[%s669] sm:$0xff]
        %671 = vst [vmem:[#allocation2] sm:$0xf] %v670
        %673 = vrot.lane.b32.xlu0 %v670, 127
        %v674 = vpop.permute.xlu0 %673
        %v675 = vrot.slane %v674, 4
        %v676 = vsel %vm207, %v674, %v675
        %678 = vst [vmem:[#allocation2 + $0x4] sm:$0xf] %v676
        %679 = vrot.lane.b32.xlu0 %v670, 126
        %v680 = vpop.permute.xlu0 %679
        %v681 = vrot.slane %v680, 4
        %v682 = vsel %vm214, %v680, %v681
        %684 = vst [vmem:[#allocation2 + $0x8] sm:$0xf] %v682
        %685 = vrot.lane.b32.xlu0 %v670, 116
        %v686 = vpop.permute.xlu0 %685
        %v687 = vrot.slane %v686, 4
        %v688 = vsel %vm221, %v686, %v687
        %690 = vst [vmem:[#allocation2 + $0xc] sm:$0xf] %v688
        %691 = vrot.lane.b32.xlu0 %v670, 115
        %v692 = vpop.permute.xlu0 %691
        %v693 = vrot.slane %v692, 4
        %v694 = vsel %vm228, %v692, %v693
        %696 = vst [vmem:[#allocation2 + $0x10] sm:$0xf] %v694
        %697 = vrot.lane.b32.xlu0 %v670, 114
        %v698 = vpop.permute.xlu0 %697
        %v699 = vrot.slane %v698, 4
        %v700 = vsel %vm235, %v698, %v699
        %702 = vst [vmem:[#allocation2 + $0x14] sm:$0xf] %v700
        %703 = vrot.lane.b32.xlu0 %v670, 104
        %v704 = vpop.permute.xlu0 %703
        %v705 = vrot.slane %v704, 4
        %v706 = vsel %vm242, %v704, %v705
        %708 = vst [vmem:[#allocation2 + $0x18] sm:$0xf] %v706
        %709 = vrot.lane.b32.xlu0 %v670, 103
        %v710 = vpop.permute.xlu0 %709
        %v711 = vrot.slane %v710, 4
        %v712 = vsel %vm249, %v710, %v711
        %714 = vst [vmem:[#allocation2 + $0x1c] sm:$0xf] %v712
        %715 = vrot.lane.b32.xlu0 %v670, 102
        %v716 = vpop.permute.xlu0 %715
        %v717 = vrot.slane %v716, 4
        %v718 = vsel %vm256, %v716, %v717
        %720 = vst [vmem:[#allocation2 + $0x20] sm:$0xf] %v718
        %v721 = vld [vmem:[%s606] sm:$0xf]
        %v722 = vld [vmem:[#allocation2] sm:$0xf]
        %v723 = vld [vmem:[#allocation2 + $0x4] sm:$0xf]
        %v724 = vld [vmem:[#allocation2 + $0x8] sm:$0xf]
        %v725 = vld [vmem:[#allocation2 + $0xc] sm:$0xf]
        %v726 = vld [vmem:[#allocation2 + $0x10] sm:$0xf]
        %v727 = vld [vmem:[#allocation2 + $0x14] sm:$0xf]
        %v728 = vld [vmem:[#allocation2 + $0x18] sm:$0xf]
        %v729 = vld [vmem:[#allocation2 + $0x1c] sm:$0xf]
        %v730 = vld [vmem:[#allocation2 + $0x20] sm:$0xf]
        %v740 = vunpack.c.l.b16 %v722
        %v741 = vunpack.c.l.b16 %v723
        %v742 = vunpack.c.l.b16 %v724
        %v743 = vunpack.c.l.b16 %v725
        %v744 = vunpack.c.l.b16 %v726
        %v745 = vunpack.c.l.b16 %v727
        %v746 = vunpack.c.l.b16 %v728
        %v747 = vunpack.c.l.b16 %v729
        %v748 = vunpack.c.l.b16 %v730
        %v749 = vpack.c.b16 %v741, %v740
        %v750 = vpack.c.b16 %v743, %v742
        %v751 = vpack.c.b16 %v745, %v744
        %v752 = vpack.c.b16 %v747, %v746
        %v753 = vpack.c.b16 %v748, %v748
        %v759 = vsel %vm297, %v721, 0
        %v762 = vsel %vm301, %v753, 0
        %764 = vmatpush.bf16.msra.mxu0 0
        %765 = vmatpush.bf16.msra.mxu0 0
        %766 = vmatpush.bf16.msra.mxu0 0
        %767 = vmatpush.bf16.msra.mxu0 %v762
        %768 = vmatpush.bf16.msra.mxu0 %v752
        %769 = vmatpush.bf16.msra.mxu0 %v751
        %770 = vmatpush.bf16.msra.mxu0 %v750
        %771 = vmatpush.bf16.msra.mxu0 %v749
        %772 = vmatmul.bf16.gmra.mxu0 %v759
        %v773 = vpop.f32.mrf.mxu0
        %v774 = vadd.f32 0.0, %v773
        %v775 = vpop.f32.mrf.mxu0
        %776 = vdwg.mxu0
        %v777 = vld [vmem:[%s430] sm:$0xff]
        %v778 = vadd.f32 %v777, %v774
        %779 = vst [vmem:[%s430] sm:$0xff] %v778
        %s780 = sand.u32 %s89, 1
        %s781 = scalar_lea.sflag [#allocation5], %s780
        %s782 = sand.u32 %s89, 1
        %s783 = smul.addr %s782, 16
        %s784 = scalar_lea.vmem [#allocation8], %s783
        // Predicated region
        $region37: #{tpu_custom_call.1} parent=27 // pred_check
          %p785 = pneg %p99
        $region38: #{tpu_custom_call.1} parent=27 // pred_check_branch
          %787 = sbr.rel (%p785) target = $region40
        $region39: #{tpu_custom_call.1} parent=27 // pred_region
          %s788 = smul.u32 2, %s25
          %790 = vsyncadd %s781, 0
          %s791 = smul.addr %s24, 4
          %s792 = sadd.s32 %s788, %s791
          %s793 = smul.addr %s792, 8
          %s794 = scalar_lea.hbm %s2, %s793
          %s795 = sshll.u32 %s784, 4
          %s796 = int_to_ptr.vmem [resolvable:$true] %s795
          %s797 = sshll.u32 %s794, 4
          %s798 = int_to_ptr.hbm [resolvable:$true] %s797
          %803 = dma.vmem_to_hbm [thread:$0]  %s796, 256, %s798, %s781, 128, 128, 8
        $region40: #{tpu_custom_call.1} parent=27 // pred_fallthru
          _
      $region28: #{tpu_custom_call.1} parent=5 // pred_fallthru
        _
      %p804 = scmp.le.s32.totalorder 2, %s15
      // Predicated region
      $region41: #{tpu_custom_call.1} parent=5 // pred_check
        %p805 = pneg %p804
      $region42: #{tpu_custom_call.1} parent=5 // pred_check_branch
        %807 = sbr.rel (%p805) target = $region44
      $region43: #{tpu_custom_call.1} parent=5 // pred_region
        %s808 = ssub.s32 %s15, 2
        // Predicated region
        $region45: #{tpu_custom_call.1} parent=43 // pred_check
          %p809 = pneg %p105
        $region46: #{tpu_custom_call.1} parent=43 // pred_check_branch
          %811 = sbr.rel (%p809) target = $region48
        $region47: #{tpu_custom_call.1} parent=43 // pred_region
          %s812 = sand.u32 %s90, 1
          %s813 = scalar_lea.sflag [#allocation5], %s812
          %s814 = sand.u32 %s90, 1
          %s815 = smul.addr %s814, 16
          %s816 = scalar_lea.vmem [#allocation8], %s815
          %818 = dma.done %s813, 256
        $region48: #{tpu_custom_call.1} parent=43 // pred_fallthru
          _
      $region44: #{tpu_custom_call.1} parent=5 // pred_fallthru
        _
    $region6: #{tpu_custom_call.1} parent=1 // loop_footer
      %s19 = sadd.s32 1, %s15
    $region7: #{tpu_custom_call.1} parent=1 // loop_footer_branch
      %14 = sbr.rel target = $region3
    $region8: #{tpu_custom_call.1} parent=1 // loop_exit
      _
    %819 = vsyncpa [#allocation4], 1
    %s820 = scalar_lea.sflag [#allocation4], 1
    %821 = vsyncpa %s820, 1
    %822 = vsyncpa [#allocation7], 1
    %823 = vsyncpa [#allocation5], 1
    %s824 = scalar_lea.sflag [#allocation5], 1
    %825 = vsyncpa %s824, 1

</llo_original>
